<compile_context>
chip_gen: v5e
topology: v5e:2x2
jax: 0.10.0
libtpu: 0.0.40
codegen_flags: <defaults>
</compile_context>

<pallas_src>
import functools

import jax
import jax.numpy as jnp
from jax.experimental import pallas as pl
from jax.experimental.pallas import tpu as pltpu


_LANE = 128      # last-dim tile granularity
_SUBLANE = 8     # second-to-last dim granularity for f32


def _round_up(n, m):
    return ((n + m - 1) // m) * m


def _cdiv(a, b):
    return (a + b - 1) // b


# --------------------------------------------------------------------------
# Kernels
# --------------------------------------------------------------------------

def _linear(h, w_ref, b_ref):
    # Cast the activation to the (possibly bf16) weight dtype right before the
    # MXU push so EVERY layer runs at the low-precision MXU rate; the
    # accumulator, bias add and ReLU stay in f32.
    return jnp.dot(h.astype(w_ref.dtype), w_ref[...],
                   preferred_element_type=jnp.float32) + b_ref[...]


def _relu(v):
    return jnp.maximum(v, 0.0)


def _dann_kernel_fused(x_ref,
                       fw0, fb0, fw1, fb1, fw2, fb2,
                       cw0, cb0, cw1, cb1, cw2, cb2,
                       out_ref):
    """Fully fused heads (block-diagonal); used only when 2*hidden <= 128."""
    h = _relu(_linear(x_ref[...], fw0, fb0))
    h = _relu(_linear(h, fw1, fb1))
    feat = _relu(_linear(h, fw2, fb2))

    c = _relu(_linear(feat, cw0, cb0))
    c = _relu(_linear(c, cw1, cb1))
    out_ref[...] = _linear(c, cw2, cb2).astype(out_ref.dtype)


def _dann_kernel_split(x_ref,
                       fw0, fb0, fw1, fb1, fw2, fb2,
                       cw0, cb0,
                       lw1, lb1, lw2, lb2,
                       dw1, db1, dw2, db2,
                       out_ref, *, hid_p):
    """Layer-0 of both heads fused (concat), layers 1/2 per-head (no 2x MACs)."""
    h = _relu(_linear(x_ref[...], fw0, fb0))
    h = _relu(_linear(h, fw1, fb1))
    feat = _relu(_linear(h, fw2, fb2))

    c0 = _relu(_linear(feat, cw0, cb0))          # [label | domain], each hid_p wide
    cl = _relu(_linear(c0[:, :hid_p], lw1, lb1))
    cd = _relu(_linear(c0[:, hid_p:], dw1, db1))
    # Label/domain layer-2 weights & biases are padded into DISJOINT output
    # columns, so a plain add packs both heads into one lane-dense slab.
    out = _linear(cl, lw2, lb2) + _linear(cd, dw2, db2)
    out_ref[...] = out.astype(out_ref.dtype)


# --------------------------------------------------------------------------
# One-time weight preparation (hoisted out of the forward call)
# --------------------------------------------------------------------------

def prepare_params(params, *, param_dtype=None):
    """Fuse + lane-pad the 9 (W, b) pairs once.

    params: 9 (W, b) pairs, W stored [in, out]; order = feature_extractor (3),
            label_classifier (3), domain_classifier (3).
    param_dtype: optional low-precision dtype (e.g. jnp.bfloat16) for the
            matmul weights; biases and accumulation stay f32.
    """
    f32 = jnp.float32
    (fw0, fb0), (fw1, fb1), (fw2, fb2) = params[0:3]
    (lw0, lb0), (lw1, lb1), (lw2, lb2) = params[3:6]
    (dw0, db0), (dw1, db1), (dw2, db2) = params[6:9]

    fw0 = jnp.asarray(fw0, f32)
    input_dim, hidden_dim = fw0.shape
    feat_dim = fw2.shape[1]            # feature-extractor output width (== output_dim)
    output_dim = lw2.shape[1]
    domain_dim = dw2.shape[1]

    hid_p = _round_up(hidden_dim, _LANE)
    feat_p = _round_up(feat_dim, _LANE)
    out_p = _round_up(output_dim + domain_dim, _LANE)
    fuse_head = (2 * hidden_dim) <= _LANE        # block-diag head free only inside one lane tile
    head_p = _round_up(2 * hidden_dim, _LANE) if fuse_head else 2 * hid_p

    def pad_w(w, rows, cols):
        w = jnp.asarray(w, f32)
        return jnp.pad(w, ((0, rows - w.shape[0]), (0, cols - w.shape[1])))

    def pad_b(b, cols):
        b = jnp.asarray(b, f32)
        return jnp.pad(b, (0, cols - b.shape[0])).reshape(1, cols)

    H = hidden_dim

    # Feature extractor. NOTE: FW0's K rows stay at input_dim (x feature axis
    # is not lane-padded).
    FW0, FB0 = pad_w(fw0, input_dim, hid_p), pad_b(fb0, hid_p)
    FW1, FB1 = pad_w(fw1, hid_p, hid_p), pad_b(fb1, hid_p)
    FW2, FB2 = pad_w(fw2, hid_p, feat_p), pad_b(fb2, feat_p)

    if fuse_head:
        # Layer 0: concat along out axis. Layers 1/2: block-diagonal.
        CW0 = pad_w(jnp.concatenate([jnp.asarray(lw0, f32),
                                     jnp.asarray(dw0, f32)], axis=1), feat_p, head_p)
        CB0 = pad_b(jnp.concatenate([jnp.asarray(lb0, f32),
                                     jnp.asarray(db0, f32)]), head_p)
        cw1 = (jnp.zeros((2 * H, 2 * H), f32)
               .at[:H, :H].set(jnp.asarray(lw1, f32))
               .at[H:, H:].set(jnp.asarray(dw1, f32)))
        CW1 = pad_w(cw1, head_p, head_p)
        CB1 = pad_b(jnp.concatenate([jnp.asarray(lb1, f32),
                                     jnp.asarray(db1, f32)]), head_p)
        cw2 = (jnp.zeros((2 * H, output_dim + domain_dim), f32)
               .at[:H, :output_dim].set(jnp.asarray(lw2, f32))
               .at[H:, output_dim:].set(jnp.asarray(dw2, f32)))
        CW2 = pad_w(cw2, head_p, out_p)
        CB2 = pad_b(jnp.concatenate([jnp.asarray(lb2, f32),
                                     jnp.asarray(db2, f32)]), out_p)
        weights = [FW0, FB0, FW1, FB1, FW2, FB2,
                   CW0, CB0, CW1, CB1, CW2, CB2]
    else:
        # Layer 0 fused (each head padded to hid_p so the split is lane-aligned);
        # layers 1/2 kept per-head.
        CW0 = jnp.concatenate([pad_w(lw0, feat_p, hid_p),
                               pad_w(dw0, feat_p, hid_p)], axis=1)
        CB0 = jnp.concatenate([pad_b(lb0, hid_p), pad_b(db0, hid_p)], axis=1)
        LW1, LB1 = pad_w(lw1, hid_p, hid_p), pad_b(lb1, hid_p)
        DW1, DB1 = pad_w(dw1, hid_p, hid_p), pad_b(db1, hid_p)
        LW2 = (jnp.zeros((hid_p, out_p), f32)
               .at[:H, :output_dim].set(jnp.asarray(lw2, f32)))
        LB2 = jnp.zeros((1, out_p), f32).at[0, :output_dim].set(jnp.asarray(lb2, f32))
        DW2 = (jnp.zeros((hid_p, out_p), f32)
               .at[:H, output_dim:output_dim + domain_dim].set(jnp.asarray(dw2, f32)))
        DB2 = (jnp.zeros((1, out_p), f32)
               .at[0, output_dim:output_dim + domain_dim].set(jnp.asarray(db2, f32)))
        weights = [FW0, FB0, FW1, FB1, FW2, FB2,
                   CW0, CB0, LW1, LB1, LW2, LB2, DW1, DB1, DW2, DB2]

    if param_dtype is not None:
        # Matrices sit at even indices; biases stay f32 for the accumulator.
        weights = [w.astype(param_dtype) if (i % 2 == 0) else w
                   for i, w in enumerate(weights)]

    return dict(weights=weights,
                input_dim=input_dim, hidden_dim=hidden_dim,
                output_dim=output_dim, domain_dim=domain_dim,
                hid_p=hid_p, feat_p=feat_p, head_p=head_p, out_p=out_p,
                fuse_head=fuse_head)


# --------------------------------------------------------------------------
# Forward
# --------------------------------------------------------------------------

def dann_forward(x, prepared, *, block_b=None):
    """Fused DANN forward. Returns (label_output [B, out], domain_output [B, dom])."""
    B, input_dim = x.shape
    assert input_dim == prepared["input_dim"], (input_dim, prepared["input_dim"])

    weights = prepared["weights"]
    hid_p = prepared["hid_p"]
    feat_p = prepared["feat_p"]
    head_p = prepared["head_p"]
    out_p = prepared["out_p"]
    output_dim = prepared["output_dim"]
    domain_dim = prepared["domain_dim"]
    fuse_head = prepared["fuse_head"]

    # ---- batch tiling: minimize padding, even >=2 steps for v7x megacore ----
    if block_b is None:
        if B <= 256:
            n_steps = 1                      # v5e/v6e: single tile, no grid overhead
        else:
            n_steps = max(2, _cdiv(B, 512))
            if n_steps % 2:                  # balance the 2 v7x TensorCores
                n_steps += 1
        block_b = _round_up(_cdiv(B, n_steps), _SUBLANE)
    block_b = max(_SUBLANE, _round_up(block_b, _SUBLANE))
    b_pad = _round_up(B, block_b)
    grid = (b_pad // block_b,)

    # Only the batch axis is padded (feature axis stays at input_dim).
    x_p = x if b_pad == B else jnp.pad(x, ((0, b_pad - B), (0, 0)))

    # x / output tiled over batch; weights & biases fully VMEM-resident.
    x_spec = pl.BlockSpec((block_b, input_dim), lambda i: (i, 0))
    w_spec = pl.BlockSpec(memory_space=pltpu.MemorySpace.VMEM)
    in_specs = [x_spec] + [w_spec] * len(weights)
    out_specs = pl.BlockSpec((block_b, out_p), lambda i: (i, 0))
    out_shape = jax.ShapeDtypeStruct((b_pad, out_p), jnp.float32)

    if fuse_head:
        kernel = _dann_kernel_fused
        per_row = (input_dim * hid_p + hid_p * hid_p + hid_p * feat_p
                   + feat_p * head_p + head_p * head_p + head_p * out_p)
    else:
        kernel = functools.partial(_dann_kernel_split, hid_p=hid_p)
        per_row = (input_dim * hid_p + hid_p * hid_p + hid_p * feat_p
                   + feat_p * (2 * hid_p) + 2 * hid_p * hid_p + 2 * hid_p * out_p)

    weights_bytes = sum(int(w.size) * w.dtype.itemsize for w in weights)
    x_tile_bytes = block_b * input_dim * x_p.dtype.itemsize
    out_tile_bytes = block_b * out_p * 4
    act_bytes = 4 * block_b * max(hid_p, feat_p, head_p, out_p) * 4
    vmem_limit = int(1.25 * (weights_bytes + 2 * (x_tile_bytes + out_tile_bytes)
                             + act_bytes)) + (8 << 20)
    vmem_limit = min(max(vmem_limit, 32 << 20), 100 << 20)

    cost = pl.CostEstimate(
        flops=2 * b_pad * per_row,
        transcendentals=0,
        bytes_accessed=(x_p.size * x_p.dtype.itemsize + weights_bytes
                        + b_pad * out_p * 4))

    out = pl.pallas_call(
        kernel,
        out_shape=out_shape,
        grid_spec=pltpu.PrefetchScalarGridSpec(
            num_scalar_prefetch=0,
            grid=grid,
            in_specs=in_specs,
            out_specs=out_specs,
        ),
        compiler_params=pltpu.CompilerParams(
            dimension_semantics=("parallel",),
            vmem_limit_bytes=vmem_limit),
        cost_estimate=cost,
    )(x_p, *weights)

    label_out = out[:B, :output_dim]
    domain_out = out[:B, output_dim:output_dim + domain_dim]
    return label_out, domain_out


# --------------------------------------------------------------------------
# Params init + plain-JAX reference
# --------------------------------------------------------------------------

def init_dann_params(key, input_dim, hidden_dim, output_dim, domain_dim):
    """Deterministic init matching nn.Linear's default. W stored [in, out]."""
    dims = [
        # feature_extractor
        (input_dim, hidden_dim), (hidden_dim, hidden_dim), (hidden_dim, output_dim),
        # label_classifier
        (output_dim, hidden_dim), (hidden_dim, hidden_dim), (hidden_dim, output_dim),
        # domain_classifier
        (output_dim, hidden_dim), (hidden_dim, hidden_dim), (hidden_dim, domain_dim),
    ]
    params = []
    for (fan_in, fan_out) in dims:
        key, kw, kb = jax.random.split(key, 3)
        bound = 1.0 / jnp.sqrt(fan_in)
        w = jax.random.uniform(kw, (fan_in, fan_out), jnp.float32, -bound, bound)
        b = jax.random.uniform(kb, (fan_out,), jnp.float32, -bound, bound)
        params.append((w, b))
    return params


def dann_reference(x, params):
    """Plain-JAX reference for the numerical check."""
    def mlp(h, layers, final_relu):
        n = len(layers)
        for i, (w, b) in enumerate(layers):
            h = h @ w + b
            if i < n - 1 or final_relu:
                h = jnp.maximum(h, 0.0)
        return h
    feat = mlp(x, params[0:3], final_relu=True)
    label = mlp(feat, params[3:6], final_relu=False)
    domain = mlp(feat, params[6:9], final_relu=False)
    return label, domain


if __name__ == "__main__":
    key = jax.random.PRNGKey(0)
    alpha = 0.5  # gradient-reversal scale: identity in the forward pass, unused here

    # --- Case 1: fused-head path (2*hidden <= 128), f32 ---
    batch, input_dim, hidden_dim, output_dim, domain_dim = 8, 32, 32, 16, 4
    key, kx = jax.random.split(key)
    x = jax.random.normal(kx, (batch, input_dim), jnp.float32)
    params = init_dann_params(key, input_dim, hidden_dim, output_dim, domain_dim)

    prepared = prepare_params(params)
    label_out, domain_out = dann_forward(x, prepared)
    jax.block_until_ready((label_out, domain_out))

    ref_label, ref_domain = dann_reference(x, params)
    assert label_out.shape == (batch, output_dim), label_out.shape
    assert domain_out.shape == (batch, domain_dim), domain_out.shape
    assert jnp.allclose(label_out, ref_label, atol=1e-4, rtol=1e-4)
    assert jnp.allclose(domain_out, ref_domain, atol=1e-4, rtol=1e-4)

    # --- Case 2: split-head path (2*hidden > 128), f32 ---
    batch2, hidden2 = 16, 128
    key, kx2, kp2 = jax.random.split(key, 3)
    x2 = jax.random.normal(kx2, (batch2, input_dim), jnp.float32)
    params2 = init_dann_params(kp2, input_dim, hidden2, output_dim, domain_dim)
    prepared2 = prepare_params(params2)
    l2, d2 = dann_forward(x2, prepared2)
    jax.block_until_ready((l2, d2))
    rl2, rd2 = dann_reference(x2, params2)
    assert l2.shape == (batch2, output_dim) and d2.shape == (batch2, domain_dim)
    assert jnp.allclose(l2, rl2, atol=1e-3, rtol=1e-3)
    assert jnp.allclose(d2, rd2, atol=1e-3, rtol=1e-3)

    # --- Case 3: bf16 weight/activation MXU path (f32 accumulation) ---
    prepared_bf16 = prepare_params(params, param_dtype=jnp.bfloat16)
    lb, db = dann_forward(x, prepared_bf16)
    jax.block_until_ready((lb, db))
    assert jnp.allclose(lb, ref_label, atol=1e-1, rtol=1e-1)
    assert jnp.allclose(db, ref_domain, atol=1e-1, rtol=1e-1)

    print("KERNEL_OK")
</pallas_src>

<mosaic_0001>
module attributes {stable_mosaic.version = 11 : i64} {
  func.func @_dann_kernel_fused(%arg0: i32, %arg1: memref<8x32xf32, #tpu.memory_space<vmem>>, %arg2: memref<32x128xf32, #tpu.memory_space<vmem>>, %arg3: memref<1x128xf32, #tpu.memory_space<vmem>>, %arg4: memref<128x128xf32, #tpu.memory_space<vmem>>, %arg5: memref<1x128xf32, #tpu.memory_space<vmem>>, %arg6: memref<128x128xf32, #tpu.memory_space<vmem>>, %arg7: memref<1x128xf32, #tpu.memory_space<vmem>>, %arg8: memref<128x128xf32, #tpu.memory_space<vmem>>, %arg9: memref<1x128xf32, #tpu.memory_space<vmem>>, %arg10: memref<128x128xf32, #tpu.memory_space<vmem>>, %arg11: memref<1x128xf32, #tpu.memory_space<vmem>>, %arg12: memref<128x128xf32, #tpu.memory_space<vmem>>, %arg13: memref<1x128xf32, #tpu.memory_space<vmem>>, %arg14: memref<8x128xf32, #tpu.memory_space<vmem>>) attributes {dimension_semantics = [#tpu.dimension_semantics<parallel>], iteration_bounds = array<i64: 1>, scalar_prefetch = 0 : i64, scratch_operands = 0 : i64, tpu.core_type = #tpu.core_type<tc>, window_params = [{transform_indices = @transform_0, window_bounds = array<i64: 8, 32>}, {pipeline_mode = #tpu.pipeline_mode<synchronous>, transform_indices = @transform_1, window_bounds = array<i64: 32, 128>}, {pipeline_mode = #tpu.pipeline_mode<synchronous>, transform_indices = @transform_2, window_bounds = array<i64: 1, 128>}, {pipeline_mode = #tpu.pipeline_mode<synchronous>, transform_indices = @transform_3, window_bounds = array<i64: 128, 128>}, {pipeline_mode = #tpu.pipeline_mode<synchronous>, transform_indices = @transform_4, window_bounds = array<i64: 1, 128>}, {pipeline_mode = #tpu.pipeline_mode<synchronous>, transform_indices = @transform_5, window_bounds = array<i64: 128, 128>}, {pipeline_mode = #tpu.pipeline_mode<synchronous>, transform_indices = @transform_6, window_bounds = array<i64: 1, 128>}, {pipeline_mode = #tpu.pipeline_mode<synchronous>, transform_indices = @transform_7, window_bounds = array<i64: 128, 128>}, {pipeline_mode = #tpu.pipeline_mode<synchronous>, transform_indices = @transform_8, window_bounds = array<i64: 1, 128>}, {pipeline_mode = #tpu.pipeline_mode<synchronous>, transform_indices = @transform_9, window_bounds = array<i64: 128, 128>}, {pipeline_mode = #tpu.pipeline_mode<synchronous>, transform_indices = @transform_10, window_bounds = array<i64: 1, 128>}, {pipeline_mode = #tpu.pipeline_mode<synchronous>, transform_indices = @transform_11, window_bounds = array<i64: 128, 128>}, {pipeline_mode = #tpu.pipeline_mode<synchronous>, transform_indices = @transform_12, window_bounds = array<i64: 1, 128>}, {transform_indices = @transform_13, window_bounds = array<i64: 8, 128>}]} {
    %c0 = arith.constant 0 : index
    %c0_0 = arith.constant 0 : index
    %0 = vector.load %arg1[%c0, %c0_0] : memref<8x32xf32, #tpu.memory_space<vmem>>, vector<8x32xf32>
    %c0_1 = arith.constant 0 : index
    %c0_2 = arith.constant 0 : index
    %1 = vector.load %arg2[%c0_1, %c0_2] : memref<32x128xf32, #tpu.memory_space<vmem>>, vector<32x128xf32>
    %cst = arith.constant dense<0.000000e+00> : vector<8x128xf32>
    %2 = tpu.matmul %0, %1, %cst {dimension_numbers = #tpu.dot_dimension_numbers<[1], [0], [0], [1], [0, 0, 1, 1], [], []>} : vector<8x32xf32>, vector<32x128xf32>, vector<8x128xf32> -> vector<8x128xf32>
    %c0_3 = arith.constant 0 : index
    %c0_4 = arith.constant 0 : index
    %3 = vector.load %arg3[%c0_3, %c0_4] : memref<1x128xf32, #tpu.memory_space<vmem>>, vector<1x128xf32>
    %4 = vector.broadcast %3 : vector<1x128xf32> to vector<8x128xf32>
    %5 = arith.addf %2, %4 : vector<8x128xf32>
    %cst_5 = arith.constant 0.000000e+00 : f32
    %6 = vector.broadcast %cst_5 : f32 to vector<8x128xf32>
    %7 = arith.maximumf %5, %6 : vector<8x128xf32>
    %c0_6 = arith.constant 0 : index
    %c0_7 = arith.constant 0 : index
    %8 = vector.load %arg4[%c0_6, %c0_7] : memref<128x128xf32, #tpu.memory_space<vmem>>, vector<128x128xf32>
    %cst_8 = arith.constant dense<0.000000e+00> : vector<8x128xf32>
    %9 = tpu.matmul %7, %8, %cst_8 {dimension_numbers = #tpu.dot_dimension_numbers<[1], [0], [0], [1], [0, 0, 1, 1], [], []>} : vector<8x128xf32>, vector<128x128xf32>, vector<8x128xf32> -> vector<8x128xf32>
    %c0_9 = arith.constant 0 : index
    %c0_10 = arith.constant 0 : index
    %10 = vector.load %arg5[%c0_9, %c0_10] : memref<1x128xf32, #tpu.memory_space<vmem>>, vector<1x128xf32>
    %11 = vector.broadcast %10 : vector<1x128xf32> to vector<8x128xf32>
    %12 = arith.addf %9, %11 : vector<8x128xf32>
    %cst_11 = arith.constant 0.000000e+00 : f32
    %13 = vector.broadcast %cst_11 : f32 to vector<8x128xf32>
    %14 = arith.maximumf %12, %13 : vector<8x128xf32>
    %c0_12 = arith.constant 0 : index
    %c0_13 = arith.constant 0 : index
    %15 = vector.load %arg6[%c0_12, %c0_13] : memref<128x128xf32, #tpu.memory_space<vmem>>, vector<128x128xf32>
    %cst_14 = arith.constant dense<0.000000e+00> : vector<8x128xf32>
    %16 = tpu.matmul %14, %15, %cst_14 {dimension_numbers = #tpu.dot_dimension_numbers<[1], [0], [0], [1], [0, 0, 1, 1], [], []>} : vector<8x128xf32>, vector<128x128xf32>, vector<8x128xf32> -> vector<8x128xf32>
    %c0_15 = arith.constant 0 : index
    %c0_16 = arith.constant 0 : index
    %17 = vector.load %arg7[%c0_15, %c0_16] : memref<1x128xf32, #tpu.memory_space<vmem>>, vector<1x128xf32>
    %18 = vector.broadcast %17 : vector<1x128xf32> to vector<8x128xf32>
    %19 = arith.addf %16, %18 : vector<8x128xf32>
    %cst_17 = arith.constant 0.000000e+00 : f32
    %20 = vector.broadcast %cst_17 : f32 to vector<8x128xf32>
    %21 = arith.maximumf %19, %20 : vector<8x128xf32>
    %c0_18 = arith.constant 0 : index
    %c0_19 = arith.constant 0 : index
    %22 = vector.load %arg8[%c0_18, %c0_19] : memref<128x128xf32, #tpu.memory_space<vmem>>, vector<128x128xf32>
    %cst_20 = arith.constant dense<0.000000e+00> : vector<8x128xf32>
    %23 = tpu.matmul %21, %22, %cst_20 {dimension_numbers = #tpu.dot_dimension_numbers<[1], [0], [0], [1], [0, 0, 1, 1], [], []>} : vector<8x128xf32>, vector<128x128xf32>, vector<8x128xf32> -> vector<8x128xf32>
    %c0_21 = arith.constant 0 : index
    %c0_22 = arith.constant 0 : index
    %24 = vector.load %arg9[%c0_21, %c0_22] : memref<1x128xf32, #tpu.memory_space<vmem>>, vector<1x128xf32>
    %25 = vector.broadcast %24 : vector<1x128xf32> to vector<8x128xf32>
    %26 = arith.addf %23, %25 : vector<8x128xf32>
    %cst_23 = arith.constant 0.000000e+00 : f32
    %27 = vector.broadcast %cst_23 : f32 to vector<8x128xf32>
    %28 = arith.maximumf %26, %27 : vector<8x128xf32>
    %c0_24 = arith.constant 0 : index
    %c0_25 = arith.constant 0 : index
    %29 = vector.load %arg10[%c0_24, %c0_25] : memref<128x128xf32, #tpu.memory_space<vmem>>, vector<128x128xf32>
    %cst_26 = arith.constant dense<0.000000e+00> : vector<8x128xf32>
    %30 = tpu.matmul %28, %29, %cst_26 {dimension_numbers = #tpu.dot_dimension_numbers<[1], [0], [0], [1], [0, 0, 1, 1], [], []>} : vector<8x128xf32>, vector<128x128xf32>, vector<8x128xf32> -> vector<8x128xf32>
    %c0_27 = arith.constant 0 : index
    %c0_28 = arith.constant 0 : index
    %31 = vector.load %arg11[%c0_27, %c0_28] : memref<1x128xf32, #tpu.memory_space<vmem>>, vector<1x128xf32>
    %32 = vector.broadcast %31 : vector<1x128xf32> to vector<8x128xf32>
    %33 = arith.addf %30, %32 : vector<8x128xf32>
    %cst_29 = arith.constant 0.000000e+00 : f32
    %34 = vector.broadcast %cst_29 : f32 to vector<8x128xf32>
    %35 = arith.maximumf %33, %34 : vector<8x128xf32>
    %c0_30 = arith.constant 0 : index
    %c0_31 = arith.constant 0 : index
    %36 = vector.load %arg12[%c0_30, %c0_31] : memref<128x128xf32, #tpu.memory_space<vmem>>, vector<128x128xf32>
    %cst_32 = arith.constant dense<0.000000e+00> : vector<8x128xf32>
    %37 = tpu.matmul %35, %36, %cst_32 {dimension_numbers = #tpu.dot_dimension_numbers<[1], [0], [0], [1], [0, 0, 1, 1], [], []>} : vector<8x128xf32>, vector<128x128xf32>, vector<8x128xf32> -> vector<8x128xf32>
    %c0_33 = arith.constant 0 : index
    %c0_34 = arith.constant 0 : index
    %38 = vector.load %arg13[%c0_33, %c0_34] : memref<1x128xf32, #tpu.memory_space<vmem>>, vector<1x128xf32>
    %39 = vector.broadcast %38 : vector<1x128xf32> to vector<8x128xf32>
    %40 = arith.addf %37, %39 : vector<8x128xf32>
    %c0_35 = arith.constant 0 : index
    %c0_36 = arith.constant 0 : index
    %41 = vector.load %arg14[%c0_35, %c0_36] : memref<8x128xf32, #tpu.memory_space<vmem>>, vector<8x128xf32>
    tpu.vector_store %arg14[%c0_35, %c0_36], %40 {strides = array<i32>} : memref<8x128xf32, #tpu.memory_space<vmem>>, vector<8x128xf32>,
    return
  }
  func.func @transform_0(%arg0: i32) -> (i32, i32) {
    %c0_i32 = arith.constant 0 : i32
    %c0_i32_0 = arith.constant 0 : i32
    return %arg0, %c0_i32 : i32, i32
  }
  func.func @transform_1(%arg0: i32) -> (i32, i32) {
    %c0_i32 = arith.constant 0 : i32
    %c0_i32_0 = arith.constant 0 : i32
    %c0_i32_1 = arith.constant 0 : i32
    return %c0_i32, %c0_i32_0 : i32, i32
  }
  func.func @transform_2(%arg0: i32) -> (i32, i32) {
    %c0_i32 = arith.constant 0 : i32
    %c0_i32_0 = arith.constant 0 : i32
    %c0_i32_1 = arith.constant 0 : i32
    return %c0_i32, %c0_i32_0 : i32, i32
  }
  func.func @transform_3(%arg0: i32) -> (i32, i32) {
    %c0_i32 = arith.constant 0 : i32
    %c0_i32_0 = arith.constant 0 : i32
    %c0_i32_1 = arith.constant 0 : i32
    return %c0_i32, %c0_i32_0 : i32, i32
  }
  func.func @transform_4(%arg0: i32) -> (i32, i32) {
    %c0_i32 = arith.constant 0 : i32
    %c0_i32_0 = arith.constant 0 : i32
    %c0_i32_1 = arith.constant 0 : i32
    return %c0_i32, %c0_i32_0 : i32, i32
  }
  func.func @transform_5(%arg0: i32) -> (i32, i32) {
    %c0_i32 = arith.constant 0 : i32
    %c0_i32_0 = arith.constant 0 : i32
    %c0_i32_1 = arith.constant 0 : i32
    return %c0_i32, %c0_i32_0 : i32, i32
  }
  func.func @transform_6(%arg0: i32) -> (i32, i32) {
    %c0_i32 = arith.constant 0 : i32
    %c0_i32_0 = arith.constant 0 : i32
    %c0_i32_1 = arith.constant 0 : i32
    return %c0_i32, %c0_i32_0 : i32, i32
  }
  func.func @transform_7(%arg0: i32) -> (i32, i32) {
    %c0_i32 = arith.constant 0 : i32
    %c0_i32_0 = arith.constant 0 : i32
    %c0_i32_1 = arith.constant 0 : i32
    return %c0_i32, %c0_i32_0 : i32, i32
  }
  func.func @transform_8(%arg0: i32) -> (i32, i32) {
    %c0_i32 = arith.constant 0 : i32
    %c0_i32_0 = arith.constant 0 : i32
    %c0_i32_1 = arith.constant 0 : i32
    return %c0_i32, %c0_i32_0 : i32, i32
  }
  func.func @transform_9(%arg0: i32) -> (i32, i32) {
    %c0_i32 = arith.constant 0 : i32
    %c0_i32_0 = arith.constant 0 : i32
    %c0_i32_1 = arith.constant 0 : i32
    return %c0_i32, %c0_i32_0 : i32, i32
  }
  func.func @transform_10(%arg0: i32) -> (i32, i32) {
    %c0_i32 = arith.constant 0 : i32
    %c0_i32_0 = arith.constant 0 : i32
    %c0_i32_1 = arith.constant 0 : i32
    return %c0_i32, %c0_i32_0 : i32, i32
  }
  func.func @transform_11(%arg0: i32) -> (i32, i32) {
    %c0_i32 = arith.constant 0 : i32
    %c0_i32_0 = arith.constant 0 : i32
    %c0_i32_1 = arith.constant 0 : i32
    return %c0_i32, %c0_i32_0 : i32, i32
  }
  func.func @transform_12(%arg0: i32) -> (i32, i32) {
    %c0_i32 = arith.constant 0 : i32
    %c0_i32_0 = arith.constant 0 : i32
    %c0_i32_1 = arith.constant 0 : i32
    return %c0_i32, %c0_i32_0 : i32, i32
  }
  func.func @transform_13(%arg0: i32) -> (i32, i32) {
    %c0_i32 = arith.constant 0 : i32
    %c0_i32_0 = arith.constant 0 : i32
    return %arg0, %c0_i32 : i32, i32
  }
}

</mosaic_0001>

<llo_original>
// kernel: tpu_custom_call.1
$region0: #{tpu_custom_call.1}
  #allocation0 [shape = 'u32[]', space=smem, size = 0x4, offset = 0x4, fixed_abs, tag = 'smem constant byte address 0x4 - core index']
  #allocation1 [shape = 'u32[72,128]{1,0:T(1,128)}', space=vmem, size = 0x9000, scoped, tag = 'internal scratch']
  %s0 = inlined_call_operand.hbm [shape: f32[8,32], index: 0, kind: input, shape index: {}]
  %s1 = inlined_call_operand.hbm [shape: f32[32,128], index: 1, kind: input, shape index: {}]
  %s2 = inlined_call_operand.vmem [shape: f32[1,128], index: 2, kind: input, shape index: {}]
  %s3 = inlined_call_operand.hbm [shape: f32[128,128], index: 3, kind: input, shape index: {}]
  %s4 = inlined_call_operand.vmem [shape: f32[1,128], index: 4, kind: input, shape index: {}]
  %s5 = inlined_call_operand.hbm [shape: f32[128,128], index: 5, kind: input, shape index: {}]
  %s6 = inlined_call_operand.vmem [shape: f32[1,128], index: 6, kind: input, shape index: {}]
  %s7 = inlined_call_operand.hbm [shape: f32[128,128], index: 7, kind: input, shape index: {}]
  %s8 = inlined_call_operand.vmem [shape: f32[1,128], index: 8, kind: input, shape index: {}]
  %s9 = inlined_call_operand.hbm [shape: f32[128,128], index: 9, kind: input, shape index: {}]
  %s10 = inlined_call_operand.vmem [shape: f32[1,128], index: 10, kind: input, shape index: {}]
  %s11 = inlined_call_operand.hbm [shape: f32[128,128], index: 11, kind: input, shape index: {}]
  %s12 = inlined_call_operand.vmem [shape: f32[1,128], index: 12, kind: input, shape index: {}]
  %s13 = inlined_call_operand.hbm [shape: f32[8,128], index: 13, kind: output, shape index: {}]
  %s14 = sld [smem:[#allocation0]]
  $region90: #{tpu_custom_call.1} parent=0
    _
  %s16 = ssub.s32 1, %s14
  %s17 = scalar_select 0, %s16, %s14
  $region1: #{tpu_custom_call.1} parent=0
    #allocation2 [shape = 'u8[4096]{0}', space=vmem, size = 0x1000, scoped, tag = 'input window, operand 0, single buffered']
    #allocation3 [shape = 's32[1]{0}', space=sflag, size = 0x4, scoped, tag = 'scoped memory for tpu_custom_call.1']
    #allocation4 [shape = 's32[1]{0}', space=sflag, size = 0x4, scoped, tag = 'scoped memory for tpu_custom_call.1']
    #allocation5 [shape = 'u8[16384]{0}', space=vmem, size = 0x4000, scoped, tag = 'input window, operand 1, single buffered']
    #allocation6 [shape = 's32[1]{0}', space=sflag, size = 0x4, scoped, tag = 'scoped memory for tpu_custom_call.1']
    #allocation7 [shape = 'u8[65536]{0}', space=vmem, size = 0x10000, scoped, tag = 'input window, operand 3, single buffered']
    #allocation8 [shape = 'u8[65536]{0}', space=vmem, size = 0x10000, scoped, tag = 'input window, operand 5, single buffered']
    #allocation9 [shape = 's32[1]{0}', space=sflag, size = 0x4, scoped, tag = 'scoped memory for tpu_custom_call.1']
    #allocation10 [shape = 'u8[65536]{0}', space=vmem, size = 0x10000, scoped, tag = 'input window, operand 7, single buffered']
    #allocation11 [shape = 'u8[65536]{0}', space=vmem, size = 0x10000, scoped, tag = 'input window, operand 9, single buffered']
    #allocation12 [shape = 's32[1]{0}', space=sflag, size = 0x4, scoped, tag = 'scoped memory for tpu_custom_call.1']
    #allocation13 [shape = 'u8[65536]{0}', space=vmem, size = 0x10000, scoped, tag = 'input window, operand 11, single buffered']
    #allocation14 [shape = 'u8[4096]{0}', space=vmem, size = 0x1000, scoped, tag = 'output window, operand 0, single buffered']
    %18 = vsyncpa [#allocation3], 0
    %19 = vsyncpa [#allocation6], 0
    %20 = vsyncpa [#allocation9], 0
    %21 = vsyncpa [#allocation12], 0
    %22 = vsyncpa [#allocation4], 0
    // Predicated region
    $region2: #{tpu_custom_call.1} parent=1 // pred_check
      _
    $region3: #{tpu_custom_call.1} parent=1 // pred_check_branch
      %24 = sbr.rel (0) target = $region5
    $region4: #{tpu_custom_call.1} parent=1 // pred_region
      %26 = vsyncadd [#allocation3], 0
      %s28 = sshll.u32 %s0, 4
      %s29 = int_to_ptr.hbm [resolvable:$true] %s28
      %s30 = sshll.u32 [#allocation2], 4
      %s31 = int_to_ptr.vmem [resolvable:$true] %s30
      %33 = dma.hbm_to_vmem [thread:$0]  %s29, 128, %s31, [#allocation3]
    $region5: #{tpu_custom_call.1} parent=1 // pred_fallthru
      _
    // Predicated region
    $region6: #{tpu_custom_call.1} parent=1 // pred_check
      _
    $region7: #{tpu_custom_call.1} parent=1 // pred_check_branch
      %35 = sbr.rel (0) target = $region9
    $region8: #{tpu_custom_call.1} parent=1 // pred_region
      %37 = vsyncadd [#allocation6], 0
      %s38 = sshll.u32 %s1, 4
      %s39 = int_to_ptr.hbm [resolvable:$true] %s38
      %s40 = sshll.u32 [#allocation5], 4
      %s41 = int_to_ptr.vmem [resolvable:$true] %s40
      %46 = dma.hbm_to_vmem [thread:$0]  %s39, 512, %s41, [#allocation6], 128, 128, 8
    $region9: #{tpu_custom_call.1} parent=1 // pred_fallthru
      _
    // Predicated region
    $region10: #{tpu_custom_call.1} parent=1 // pred_check
      _
    $region11: #{tpu_custom_call.1} parent=1 // pred_check_branch
      %48 = sbr.rel (0) target = $region13
    $region12: #{tpu_custom_call.1} parent=1 // pred_region
      _
    $region13: #{tpu_custom_call.1} parent=1 // pred_fallthru
      _
    // Predicated region
    $region14: #{tpu_custom_call.1} parent=1 // pred_check
      _
    $region15: #{tpu_custom_call.1} parent=1 // pred_check_branch
      %50 = sbr.rel (0) target = $region17
    $region16: #{tpu_custom_call.1} parent=1 // pred_region
      %52 = vsyncadd [#allocation6], 0
      %s53 = sshll.u32 %s3, 4
      %s54 = int_to_ptr.hbm [resolvable:$true] %s53
      %s55 = sshll.u32 [#allocation7], 4
      %s56 = int_to_ptr.vmem [resolvable:$true] %s55
      %61 = dma.hbm_to_vmem [thread:$0]  %s54, 2048, %s56, [#allocation6], 128, 128, 8
    $region17: #{tpu_custom_call.1} parent=1 // pred_fallthru
      _
    // Predicated region
    $region18: #{tpu_custom_call.1} parent=1 // pred_check
      _
    $region19: #{tpu_custom_call.1} parent=1 // pred_check_branch
      %63 = sbr.rel (0) target = $region21
    $region20: #{tpu_custom_call.1} parent=1 // pred_region
      _
    $region21: #{tpu_custom_call.1} parent=1 // pred_fallthru
      _
    // Predicated region
    $region22: #{tpu_custom_call.1} parent=1 // pred_check
      _
    $region23: #{tpu_custom_call.1} parent=1 // pred_check_branch
      %65 = sbr.rel (0) target = $region25
    $region24: #{tpu_custom_call.1} parent=1 // pred_region
      %67 = vsyncadd [#allocation9], 0
      %s68 = sshll.u32 %s5, 4
      %s69 = int_to_ptr.hbm [resolvable:$true] %s68
      %s70 = sshll.u32 [#allocation8], 4
      %s71 = int_to_ptr.vmem [resolvable:$true] %s70
      %76 = dma.hbm_to_vmem [thread:$0]  %s69, 2048, %s71, [#allocation9], 128, 128, 8
    $region25: #{tpu_custom_call.1} parent=1 // pred_fallthru
      _
    // Predicated region
    $region26: #{tpu_custom_call.1} parent=1 // pred_check
      _
    $region27: #{tpu_custom_call.1} parent=1 // pred_check_branch
      %78 = sbr.rel (0) target = $region29
    $region28: #{tpu_custom_call.1} parent=1 // pred_region
      _
    $region29: #{tpu_custom_call.1} parent=1 // pred_fallthru
      _
    // Predicated region
    $region30: #{tpu_custom_call.1} parent=1 // pred_check
      _
    $region31: #{tpu_custom_call.1} parent=1 // pred_check_branch
      %80 = sbr.rel (0) target = $region33
    $region32: #{tpu_custom_call.1} parent=1 // pred_region
      %82 = vsyncadd [#allocation9], 0
      %s83 = sshll.u32 %s7, 4
      %s84 = int_to_ptr.hbm [resolvable:$true] %s83
      %s85 = sshll.u32 [#allocation10], 4
      %s86 = int_to_ptr.vmem [resolvable:$true] %s85
      %91 = dma.hbm_to_vmem [thread:$0]  %s84, 2048, %s86, [#allocation9], 128, 128, 8
    $region33: #{tpu_custom_call.1} parent=1 // pred_fallthru
      _
    // Predicated region
    $region34: #{tpu_custom_call.1} parent=1 // pred_check
      _
    $region35: #{tpu_custom_call.1} parent=1 // pred_check_branch
      %93 = sbr.rel (0) target = $region37
    $region36: #{tpu_custom_call.1} parent=1 // pred_region
      _
    $region37: #{tpu_custom_call.1} parent=1 // pred_fallthru
      _
    // Predicated region
    $region38: #{tpu_custom_call.1} parent=1 // pred_check
      _
    $region39: #{tpu_custom_call.1} parent=1 // pred_check_branch
      %95 = sbr.rel (0) target = $region41
    $region40: #{tpu_custom_call.1} parent=1 // pred_region
      %97 = vsyncadd [#allocation12], 0
      %s98 = sshll.u32 %s9, 4
      %s99 = int_to_ptr.hbm [resolvable:$true] %s98
      %s100 = sshll.u32 [#allocation11], 4
      %s101 = int_to_ptr.vmem [resolvable:$true] %s100
      %106 = dma.hbm_to_vmem [thread:$0]  %s99, 2048, %s101, [#allocation12], 128, 128, 8
    $region41: #{tpu_custom_call.1} parent=1 // pred_fallthru
      _
    // Predicated region
    $region42: #{tpu_custom_call.1} parent=1 // pred_check
      _
    $region43: #{tpu_custom_call.1} parent=1 // pred_check_branch
      %108 = sbr.rel (0) target = $region45
    $region44: #{tpu_custom_call.1} parent=1 // pred_region
      _
    $region45: #{tpu_custom_call.1} parent=1 // pred_fallthru
      _
    // Predicated region
    $region46: #{tpu_custom_call.1} parent=1 // pred_check
      _
    $region47: #{tpu_custom_call.1} parent=1 // pred_check_branch
      %110 = sbr.rel (0) target = $region49
    $region48: #{tpu_custom_call.1} parent=1 // pred_region
      %112 = vsyncadd [#allocation12], 0
      %s113 = sshll.u32 %s11, 4
      %s114 = int_to_ptr.hbm [resolvable:$true] %s113
      %s115 = sshll.u32 [#allocation13], 4
      %s116 = int_to_ptr.vmem [resolvable:$true] %s115
      %121 = dma.hbm_to_vmem [thread:$0]  %s114, 2048, %s116, [#allocation12], 128, 128, 8
    $region49: #{tpu_custom_call.1} parent=1 // pred_fallthru
      _
    // Predicated region
    $region50: #{tpu_custom_call.1} parent=1 // pred_check
      _
    $region51: #{tpu_custom_call.1} parent=1 // pred_check_branch
      %123 = sbr.rel (0) target = $region53
    $region52: #{tpu_custom_call.1} parent=1 // pred_region
      _
    $region53: #{tpu_custom_call.1} parent=1 // pred_fallthru
      _
    // Predicated region
    $region54: #{tpu_custom_call.1} parent=1 // pred_check
      _
    $region55: #{tpu_custom_call.1} parent=1 // pred_check_branch
      %125 = sbr.rel (0) target = $region57
    $region56: #{tpu_custom_call.1} parent=1 // pred_region
      %127 = dma.done [#allocation3], 128
    $region57: #{tpu_custom_call.1} parent=1 // pred_fallthru
      _
    // Predicated region
    $region58: #{tpu_custom_call.1} parent=1 // pred_check
      _
    $region59: #{tpu_custom_call.1} parent=1 // pred_check_branch
      %129 = sbr.rel (0) target = $region61
    $region60: #{tpu_custom_call.1} parent=1 // pred_region
      %131 = dma.done [#allocation6], 512
    $region61: #{tpu_custom_call.1} parent=1 // pred_fallthru
      _
    // Predicated region
    $region62: #{tpu_custom_call.1} parent=1 // pred_check
      _
    $region63: #{tpu_custom_call.1} parent=1 // pred_check_branch
      %133 = sbr.rel (0) target = $region65
    $region64: #{tpu_custom_call.1} parent=1 // pred_region
      %135 = dma.done [#allocation6], 2048
    $region65: #{tpu_custom_call.1} parent=1 // pred_fallthru
      _
    // Predicated region
    $region66: #{tpu_custom_call.1} parent=1 // pred_check
      _
    $region67: #{tpu_custom_call.1} parent=1 // pred_check_branch
      %137 = sbr.rel (0) target = $region69
    $region68: #{tpu_custom_call.1} parent=1 // pred_region
      %139 = dma.done [#allocation9], 2048
    $region69: #{tpu_custom_call.1} parent=1 // pred_fallthru
      _
    // Predicated region
    $region70: #{tpu_custom_call.1} parent=1 // pred_check
      _
    $region71: #{tpu_custom_call.1} parent=1 // pred_check_branch
      %141 = sbr.rel (0) target = $region73
    $region72: #{tpu_custom_call.1} parent=1 // pred_region
      %143 = dma.done [#allocation9], 2048
    $region73: #{tpu_custom_call.1} parent=1 // pred_fallthru
      _
    // Predicated region
    $region74: #{tpu_custom_call.1} parent=1 // pred_check
      _
    $region75: #{tpu_custom_call.1} parent=1 // pred_check_branch
      %145 = sbr.rel (0) target = $region77
    $region76: #{tpu_custom_call.1} parent=1 // pred_region
      %147 = dma.done [#allocation12], 2048
    $region77: #{tpu_custom_call.1} parent=1 // pred_fallthru
      _
    // Predicated region
    $region78: #{tpu_custom_call.1} parent=1 // pred_check
      _
    $region79: #{tpu_custom_call.1} parent=1 // pred_check_branch
      %149 = sbr.rel (0) target = $region81
    $region80: #{tpu_custom_call.1} parent=1 // pred_region
      %151 = dma.done [#allocation12], 2048
    $region81: #{tpu_custom_call.1} parent=1 // pred_fallthru
      _
    %v152 = vld [vmem:[#allocation2] sm:$0xff]
    %v153 = vld [vmem:[#allocation5] sm:$0xff]
    %v154 = vld [vmem:[#allocation5 + $0x8] sm:$0xff]
    %v155 = vld [vmem:[#allocation5 + $0x10] sm:$0xff]
    %v156 = vld [vmem:[#allocation5 + $0x18] sm:$0xff]
    %v157 = vld [vmem:[%s2] sm:$0x1]
    %v159 = vperm.slane %v157, 0
    %vm161 = vcmask 261120
    %v163 = vsel %vm161, %v152, 0
    %165 = vmatpush.msra.mxu0 0.0
    %166 = vmatpush.msra.mxu0 0.0
    %167 = vmatpush.msra.mxu0 0.0
    %168 = vmatpush.msra.mxu0 0.0
    %169 = vmatpush.msra.mxu0 0.0
    %170 = vmatpush.msra.mxu0 0.0
    %171 = vmatpush.msra.mxu0 0.0
    %172 = vmatpush.msra.mxu0 0.0
    %173 = vmatpush.msra.mxu0 0.0
    %174 = vmatpush.msra.mxu0 0.0
    %175 = vmatpush.msra.mxu0 0.0
    %176 = vmatpush.msra.mxu0 0.0
    %177 = vmatpush.msra.mxu0 %v156
    %178 = vmatpush.msra.mxu0 %v155
    %179 = vmatpush.msra.mxu0 %v154
    %180 = vmatpush.msra.mxu0 %v153
    %181 = vmatmul.f32.gmra.mxu0 %v163
    %v182 = vpop.f32.mrf.mxu0
    %v183 = vadd.f32 %v159, %v182
    %184 = vdwg.mxu0
    %v185 = vmax.f32 %v183, 0.0
    %v186 = vld [vmem:[#allocation7] sm:$0xff]
    %v187 = vld [vmem:[#allocation7 + $0x8] sm:$0xff]
    %v188 = vld [vmem:[#allocation7 + $0x10] sm:$0xff]
    %v189 = vld [vmem:[#allocation7 + $0x18] sm:$0xff]
    %v190 = vld [vmem:[#allocation7 + $0x20] sm:$0xff]
    %v191 = vld [vmem:[#allocation7 + $0x28] sm:$0xff]
    %v192 = vld [vmem:[#allocation7 + $0x30] sm:$0xff]
    %v193 = vld [vmem:[#allocation7 + $0x38] sm:$0xff]
    %v194 = vld [vmem:[#allocation7 + $0x40] sm:$0xff]
    %v195 = vld [vmem:[#allocation7 + $0x48] sm:$0xff]
    %v196 = vld [vmem:[#allocation7 + $0x50] sm:$0xff]
    %v197 = vld [vmem:[#allocation7 + $0x58] sm:$0xff]
    %v198 = vld [vmem:[#allocation7 + $0x60] sm:$0xff]
    %v199 = vld [vmem:[#allocation7 + $0x68] sm:$0xff]
    %v200 = vld [vmem:[#allocation7 + $0x70] sm:$0xff]
    %v201 = vld [vmem:[#allocation7 + $0x78] sm:$0xff]
    %v202 = vld [vmem:[%s4] sm:$0x1]
    %v204 = vperm.slane %v202, 0
    %206 = vmatpush.msra.mxu0 %v201
    %207 = vmatpush.msra.mxu0 %v200
    %208 = vmatpush.msra.mxu0 %v199
    %209 = vmatpush.msra.mxu0 %v198
    %210 = vmatpush.msra.mxu0 %v197
    %211 = vmatpush.msra.mxu0 %v196
    %212 = vmatpush.msra.mxu0 %v195
    %213 = vmatpush.msra.mxu0 %v194
    %214 = vmatpush.msra.mxu0 %v193
    %215 = vmatpush.msra.mxu0 %v192
    %216 = vmatpush.msra.mxu0 %v191
    %217 = vmatpush.msra.mxu0 %v190
    %218 = vmatpush.msra.mxu0 %v189
    %219 = vmatpush.msra.mxu0 %v188
    %220 = vmatpush.msra.mxu0 %v187
    %221 = vmatpush.msra.mxu0 %v186
    %222 = vmatmul.f32.gmra.mxu0 %v185
    %v223 = vpop.f32.mrf.mxu0
    %v224 = vadd.f32 %v204, %v223
    %225 = vdwg.mxu0
    %v226 = vmax.f32 %v224, 0.0
    %v227 = vld [vmem:[#allocation8] sm:$0xff]
    %v228 = vld [vmem:[#allocation8 + $0x8] sm:$0xff]
    %v229 = vld [vmem:[#allocation8 + $0x10] sm:$0xff]
    %v230 = vld [vmem:[#allocation8 + $0x18] sm:$0xff]
    %v231 = vld [vmem:[#allocation8 + $0x20] sm:$0xff]
    %v232 = vld [vmem:[#allocation8 + $0x28] sm:$0xff]
    %v233 = vld [vmem:[#allocation8 + $0x30] sm:$0xff]
    %v234 = vld [vmem:[#allocation8 + $0x38] sm:$0xff]
    %v235 = vld [vmem:[#allocation8 + $0x40] sm:$0xff]
    %v236 = vld [vmem:[#allocation8 + $0x48] sm:$0xff]
    %v237 = vld [vmem:[#allocation8 + $0x50] sm:$0xff]
    %v238 = vld [vmem:[#allocation8 + $0x58] sm:$0xff]
    %v239 = vld [vmem:[#allocation8 + $0x60] sm:$0xff]
    %v240 = vld [vmem:[#allocation8 + $0x68] sm:$0xff]
    %v241 = vld [vmem:[#allocation8 + $0x70] sm:$0xff]
    %v242 = vld [vmem:[#allocation8 + $0x78] sm:$0xff]
    %v243 = vld [vmem:[%s6] sm:$0x1]
    %v245 = vperm.slane %v243, 0
    %247 = vmatpush.msra.mxu0 %v242
    %248 = vmatpush.msra.mxu0 %v241
    %249 = vmatpush.msra.mxu0 %v240
    %250 = vmatpush.msra.mxu0 %v239
    %251 = vmatpush.msra.mxu0 %v238
    %252 = vmatpush.msra.mxu0 %v237
    %253 = vmatpush.msra.mxu0 %v236
    %254 = vmatpush.msra.mxu0 %v235
    %255 = vmatpush.msra.mxu0 %v234
    %256 = vmatpush.msra.mxu0 %v233
    %257 = vmatpush.msra.mxu0 %v232
    %258 = vmatpush.msra.mxu0 %v231
    %259 = vmatpush.msra.mxu0 %v230
    %260 = vmatpush.msra.mxu0 %v229
    %261 = vmatpush.msra.mxu0 %v228
    %262 = vmatpush.msra.mxu0 %v227
    %263 = vmatmul.f32.gmra.mxu0 %v226
    %v264 = vpop.f32.mrf.mxu0
    %v265 = vadd.f32 %v245, %v264
    %266 = vdwg.mxu0
    %v267 = vmax.f32 %v265, 0.0
    %v268 = vld [vmem:[#allocation10] sm:$0xff]
    %v269 = vld [vmem:[#allocation10 + $0x8] sm:$0xff]
    %v270 = vld [vmem:[#allocation10 + $0x10] sm:$0xff]
    %v271 = vld [vmem:[#allocation10 + $0x18] sm:$0xff]
    %v272 = vld [vmem:[#allocation10 + $0x20] sm:$0xff]
    %v273 = vld [vmem:[#allocation10 + $0x28] sm:$0xff]
    %v274 = vld [vmem:[#allocation10 + $0x30] sm:$0xff]
    %v275 = vld [vmem:[#allocation10 + $0x38] sm:$0xff]
    %v276 = vld [vmem:[#allocation10 + $0x40] sm:$0xff]
    %v277 = vld [vmem:[#allocation10 + $0x48] sm:$0xff]
    %v278 = vld [vmem:[#allocation10 + $0x50] sm:$0xff]
    %v279 = vld [vmem:[#allocation10 + $0x58] sm:$0xff]
    %v280 = vld [vmem:[#allocation10 + $0x60] sm:$0xff]
    %v281 = vld [vmem:[#allocation10 + $0x68] sm:$0xff]
    %v282 = vld [vmem:[#allocation10 + $0x70] sm:$0xff]
    %v283 = vld [vmem:[#allocation10 + $0x78] sm:$0xff]
    %v284 = vld [vmem:[%s8] sm:$0x1]
    %v286 = vperm.slane %v284, 0
    %288 = vmatpush.msra.mxu0 %v283
    %289 = vmatpush.msra.mxu0 %v282
    %290 = vmatpush.msra.mxu0 %v281
    %291 = vmatpush.msra.mxu0 %v280
    %292 = vmatpush.msra.mxu0 %v279
    %293 = vmatpush.msra.mxu0 %v278
    %294 = vmatpush.msra.mxu0 %v277
    %295 = vmatpush.msra.mxu0 %v276
    %296 = vmatpush.msra.mxu0 %v275
    %297 = vmatpush.msra.mxu0 %v274
    %298 = vmatpush.msra.mxu0 %v273
    %299 = vmatpush.msra.mxu0 %v272
    %300 = vmatpush.msra.mxu0 %v271
    %301 = vmatpush.msra.mxu0 %v270
    %302 = vmatpush.msra.mxu0 %v269
    %303 = vmatpush.msra.mxu0 %v268
    %304 = vmatmul.f32.gmra.mxu0 %v267
    %v305 = vpop.f32.mrf.mxu0
    %v306 = vadd.f32 %v286, %v305
    %307 = vdwg.mxu0
    %v308 = vmax.f32 %v306, 0.0
    %v309 = vld [vmem:[#allocation11] sm:$0xff]
    %v310 = vld [vmem:[#allocation11 + $0x8] sm:$0xff]
    %v311 = vld [vmem:[#allocation11 + $0x10] sm:$0xff]
    %v312 = vld [vmem:[#allocation11 + $0x18] sm:$0xff]
    %v313 = vld [vmem:[#allocation11 + $0x20] sm:$0xff]
    %v314 = vld [vmem:[#allocation11 + $0x28] sm:$0xff]
    %v315 = vld [vmem:[#allocation11 + $0x30] sm:$0xff]
    %v316 = vld [vmem:[#allocation11 + $0x38] sm:$0xff]
    %v317 = vld [vmem:[#allocation11 + $0x40] sm:$0xff]
    %v318 = vld [vmem:[#allocation11 + $0x48] sm:$0xff]
    %v319 = vld [vmem:[#allocation11 + $0x50] sm:$0xff]
    %v320 = vld [vmem:[#allocation11 + $0x58] sm:$0xff]
    %v321 = vld [vmem:[#allocation11 + $0x60] sm:$0xff]
    %v322 = vld [vmem:[#allocation11 + $0x68] sm:$0xff]
    %v323 = vld [vmem:[#allocation11 + $0x70] sm:$0xff]
    %v324 = vld [vmem:[#allocation11 + $0x78] sm:$0xff]
    %v325 = vld [vmem:[%s10] sm:$0x1]
    %v327 = vperm.slane %v325, 0
    %329 = vmatpush.msra.mxu0 %v324
    %330 = vmatpush.msra.mxu0 %v323
    %331 = vmatpush.msra.mxu0 %v322
    %332 = vmatpush.msra.mxu0 %v321
    %333 = vmatpush.msra.mxu0 %v320
    %334 = vmatpush.msra.mxu0 %v319
    %335 = vmatpush.msra.mxu0 %v318
    %336 = vmatpush.msra.mxu0 %v317
    %337 = vmatpush.msra.mxu0 %v316
    %338 = vmatpush.msra.mxu0 %v315
    %339 = vmatpush.msra.mxu0 %v314
    %340 = vmatpush.msra.mxu0 %v313
    %341 = vmatpush.msra.mxu0 %v312
    %342 = vmatpush.msra.mxu0 %v311
    %343 = vmatpush.msra.mxu0 %v310
    %344 = vmatpush.msra.mxu0 %v309
    %345 = vmatmul.f32.gmra.mxu0 %v308
    %v346 = vpop.f32.mrf.mxu0
    %v347 = vadd.f32 %v327, %v346
    %348 = vdwg.mxu0
    %v349 = vmax.f32 %v347, 0.0
    %v350 = vld [vmem:[#allocation13] sm:$0xff]
    %v351 = vld [vmem:[#allocation13 + $0x8] sm:$0xff]
    %v352 = vld [vmem:[#allocation13 + $0x10] sm:$0xff]
    %v353 = vld [vmem:[#allocation13 + $0x18] sm:$0xff]
    %v354 = vld [vmem:[#allocation13 + $0x20] sm:$0xff]
    %v355 = vld [vmem:[#allocation13 + $0x28] sm:$0xff]
    %v356 = vld [vmem:[#allocation13 + $0x30] sm:$0xff]
    %v357 = vld [vmem:[#allocation13 + $0x38] sm:$0xff]
    %v358 = vld [vmem:[#allocation13 + $0x40] sm:$0xff]
    %v359 = vld [vmem:[#allocation13 + $0x48] sm:$0xff]
    %v360 = vld [vmem:[#allocation13 + $0x50] sm:$0xff]
    %v361 = vld [vmem:[#allocation13 + $0x58] sm:$0xff]
    %v362 = vld [vmem:[#allocation13 + $0x60] sm:$0xff]
    %v363 = vld [vmem:[#allocation13 + $0x68] sm:$0xff]
    %v364 = vld [vmem:[#allocation13 + $0x70] sm:$0xff]
    %v365 = vld [vmem:[#allocation13 + $0x78] sm:$0xff]
    %v366 = vld [vmem:[%s12] sm:$0x1]
    %v368 = vperm.slane %v366, 0
    %370 = vmatpush.msra.mxu0 %v365
    %371 = vmatpush.msra.mxu0 %v364
    %372 = vmatpush.msra.mxu0 %v363
    %373 = vmatpush.msra.mxu0 %v362
    %374 = vmatpush.msra.mxu0 %v361
    %375 = vmatpush.msra.mxu0 %v360
    %376 = vmatpush.msra.mxu0 %v359
    %377 = vmatpush.msra.mxu0 %v358
    %378 = vmatpush.msra.mxu0 %v357
    %379 = vmatpush.msra.mxu0 %v356
    %380 = vmatpush.msra.mxu0 %v355
    %381 = vmatpush.msra.mxu0 %v354
    %382 = vmatpush.msra.mxu0 %v353
    %383 = vmatpush.msra.mxu0 %v352
    %384 = vmatpush.msra.mxu0 %v351
    %385 = vmatpush.msra.mxu0 %v350
    %386 = vmatmul.f32.gmra.mxu0 %v349
    %v387 = vpop.f32.mrf.mxu0
    %v388 = vadd.f32 %v368, %v387
    %389 = vdwg.mxu0
    %390 = vst [vmem:[#allocation14] sm:$0xff] %v388
    // Predicated region
    $region82: #{tpu_custom_call.1} parent=1 // pred_check
      _
    $region83: #{tpu_custom_call.1} parent=1 // pred_check_branch
      %392 = sbr.rel (0) target = $region85
    $region84: #{tpu_custom_call.1} parent=1 // pred_region
      %394 = vsyncadd [#allocation4], 0
      %s396 = sshll.u32 [#allocation14], 4
      %s397 = int_to_ptr.vmem [resolvable:$true] %s396
      %s398 = sshll.u32 %s13, 4
      %s399 = int_to_ptr.hbm [resolvable:$true] %s398
      %401 = dma.vmem_to_hbm [thread:$0]  %s397, 128, %s399, [#allocation4]
    $region85: #{tpu_custom_call.1} parent=1 // pred_fallthru
      _
    // Predicated region
    $region86: #{tpu_custom_call.1} parent=1 // pred_check
      _
    $region87: #{tpu_custom_call.1} parent=1 // pred_check_branch
      %403 = sbr.rel (0) target = $region89
    $region88: #{tpu_custom_call.1} parent=1 // pred_region
      %405 = dma.done [#allocation4], 128
    $region89: #{tpu_custom_call.1} parent=1 // pred_fallthru
      _
    %406 = vsyncpa [#allocation3], 1
    %407 = vsyncpa [#allocation6], 1
    %408 = vsyncpa [#allocation9], 1
    %409 = vsyncpa [#allocation12], 1
    %410 = vsyncpa [#allocation4], 1

</llo_original>
